<compile_context>
chip_gen: v6e
topology: v6e:2x2x1
jax: 0.10.0
libtpu: 0.0.40
codegen_flags: <defaults>
</compile_context>

<pallas_src>
import functools

import jax
import jax.numpy as jnp
from jax.experimental import pallas as pl
from jax.experimental.pallas import tpu as pltpu


# ----------------------------------------------------------------------------
# Lane-dense parameter slab layout (all offsets static)
# ----------------------------------------------------------------------------
def _slab_layout(num_inputs, num_actions, hidden_size):
    NI, A, H = int(num_inputs), int(num_actions), int(hidden_size)

    def rup(x, m):
        return -(-x // m) * m

    # Lane-group width: pack narrow blocks several-across so the slab last dim
    # is a dense multiple of 128 lanes.
    if H <= 32:
        gw = 32
    elif H <= 64:
        gw = 64
    else:
        gw = rup(H, 128)
    lane_w = max(128, gw)
    n_groups = lane_w // gw

    blocks = [
        ("whead", 96, 32), ("wconv", 16, 32), ("bconv", 1, 32), ("bhead", 1, 32),
        ("w1_cnn", 16, H), ("w1_tail", NI - 16, H), ("b1", 1, H),
        ("wa", A, H), ("ba", 1, H),
        ("w2h", H, H), ("w2a", H, H), ("b2", 1, H),
        ("wv", 1, H), ("bv", 1, 1),
    ]
    blocks = [(n, r, c) for (n, r, c) in blocks if r > 0]

    # Greedy shelf packing (largest first) across the lane groups; every block's
    # row offset stays 8-aligned (sublane friendly static slices).
    heights = [0] * n_groups
    layout = {}
    for name, rows, cols in sorted(blocks, key=lambda b: -b[1]):
        g = min(range(n_groups), key=lambda i: heights[i])
        layout[name] = (heights[g], g * gw, rows, cols)
        heights[g] += rup(rows, 8)
    total_rows = max(8, rup(max(heights), 8))
    return layout, total_rows, lane_w


def pack_params(params, hidden_size):
    """One-time packing of all weights into a single lane-dense f32 slab."""
    f32 = jnp.float32
    H = int(hidden_size)
    NI = params["linear1_w"].shape[1]
    A = params["linear_action_w"].shape[1]
    layout, total_rows, lane_w = _slab_layout(NI, A, H)

    # Conv taps -> im2col weight (16, 32): row = k*4 + b*2 + c, col = b*16 + j.
    wconv = jnp.zeros((16, 32), f32)
    for b, name in enumerate(("conv1_w", "conv2_w")):
        wc = jnp.asarray(params[name], f32)                      # (16, 2, 4) [j, c, k]
        for k in range(4):
            for c in range(2):
                wconv = wconv.at[k * 4 + b * 2 + c,
                                 b * 16:(b + 1) * 16].set(wc[:, c, k])
    bconv = jnp.concatenate([params["conv1_b"],
                             params["conv2_b"]]).astype(f32)[None, :]     # (1, 32)

    # Linear(48,16) heads -> (96, 32): row = p*32 + b*16 + j, col = r*16 + b*8 + m
    # (PyTorch flat pooled index j*3+p; output o = r*8+m feeds x row r after .view(2,8)).
    whead = jnp.zeros((96, 32), f32)
    for b, name in enumerate(("out1_w", "out2_w")):
        wo3 = jnp.asarray(params[name], f32).reshape(16, 16, 3)  # [o, j, p]
        for p in range(3):
            blk = wo3[:, :, p].T                                 # (j, o)
            r0 = p * 32 + b * 16
            whead = whead.at[r0:r0 + 16, b * 8:b * 8 + 8].set(blk[:, 0:8])
            whead = whead.at[r0:r0 + 16, 16 + b * 8:16 + b * 8 + 8].set(blk[:, 8:16])
    bo1 = jnp.asarray(params["out1_b"], f32)
    bo2 = jnp.asarray(params["out2_b"], f32)
    bhead = jnp.concatenate([bo1[0:8], bo2[0:8], bo1[8:16], bo2[8:16]])[None, :]

    w1t = params["linear1_w"].T.astype(f32)                      # (NI, H)
    w2t = params["linear2_w"].T.astype(f32)                      # (2H, H)
    data = {
        "wconv": wconv, "bconv": bconv, "whead": whead, "bhead": bhead,
        "w1_cnn": w1t[0:16],
        "b1": params["linear1_b"].astype(f32)[None, :],
        "wa": params["linear_action_w"].T.astype(f32),
        "ba": params["linear_action_b"].astype(f32)[None, :],
        "w2h": w2t[0:H], "w2a": w2t[H:2 * H],
        "b2": params["linear2_b"].astype(f32)[None, :],
        "wv": params["V_w"].astype(f32),
        "bv": params["V_b"].astype(f32)[None, :],
    }
    if NI > 16:
        data["w1_tail"] = w1t[16:NI]

    slab = jnp.zeros((total_rows, lane_w), f32)
    for name, (r0, l0, rows, cols) in layout.items():
        blk = data[name]
        assert blk.shape == (rows, cols), (name, blk.shape, rows, cols)
        slab = slab.at[r0:r0 + rows, l0:l0 + cols].set(blk)
    return slab


# ----------------------------------------------------------------------------
# Fused forward
# ----------------------------------------------------------------------------
def critic_forward(slab, inputs, actions, hidden_size):
    f32 = jnp.float32
    inputs = inputs.astype(f32)
    actions = actions.astype(f32)
    B, NI = inputs.shape
    A = actions.shape[1]
    H = int(hidden_size)
    assert B == 2 and NI >= 16, "forward hard-codes batch=2 and >=16 conv inputs"
    layout, total_rows, lane_w = _slab_layout(NI, A, H)

    def kernel(inp_ref, act_ref, slab_ref, out_ref):
        def view(name):
            r0, l0, rows, cols = layout[name]
            return slab_ref[r0:r0 + rows, l0:l0 + cols]

        inp = inp_ref[...]                                    # (2, NI)
        act = act_ref[...]                                    # (2, A)

        # ---- both conv branches via one im2col matmul ----
        xT = inp[:, 0:16].T                                   # (16, 2): rows=time, cols=channel
        xb = jnp.concatenate([xT[0:8], xT[8:16]], axis=1)     # (8, 4)  col = b*2 + c
        zrow = jnp.zeros((1, 4), f32)
        xpad = jnp.concatenate([zrow, xb, zrow], axis=0)      # (10, 4) zero padding
        im2col = jnp.concatenate(
            [xpad[0:7], xpad[1:8], xpad[2:9], xpad[3:10]], axis=1)   # (7, 16) col = k*4+b*2+c

        conv = jnp.maximum(
            jnp.dot(im2col, view("wconv"), preferred_element_type=f32)
            + view("bconv"), 0.0)                             # (7, 32)

        # MaxPool1d(2): pairs (0,1),(2,3),(4,5); t=6 dropped. Lane idx = p*32 + b*16 + j.
        pooled = jnp.concatenate(
            [jnp.maximum(conv[0:1], conv[1:2]),
             jnp.maximum(conv[2:3], conv[3:4]),
             jnp.maximum(conv[4:5], conv[5:6])], axis=1)      # (1, 96)

        y = jnp.dot(pooled, view("whead"), preferred_element_type=f32) + view("bhead")
        # y lanes 0:16 = x-row0 cnn features, lanes 16:32 = x-row1 cnn features.

        # ---- bn0 (training mode, weight=1 bias=0), closed form for batch==2:
        #   d = (x0 - x1)/2 ; xn_row0 = d*rsqrt(d*d+eps) ; xn_row1 = -xn_row0.
        # Columnwise, so cnn and tail columns are normalized independently and
        # linear1 is applied with pre-split weights (no lane concat needed).
        d_c = 0.5 * (y[:, 0:16] - y[:, 16:32])                # (1, 16)
        g_c = d_c * jax.lax.rsqrt(d_c * d_c + 1e-5)
        row = jnp.dot(g_c, view("w1_cnn"), preferred_element_type=f32)   # (1, H)
        if NI > 16:
            d_t = 0.5 * (inp[0:1, 16:NI] - inp[1:2, 16:NI])
            g_t = d_t * jax.lax.rsqrt(d_t * d_t + 1e-5)
            row = row + jnp.dot(g_t, view("w1_tail"), preferred_element_type=f32)
        sgn = 1.0 - 2.0 * jax.lax.broadcasted_iota(jnp.int32, (2, 1), 0).astype(f32)
        h = jnp.tanh(sgn * row + view("b1"))                  # (2, H): rows +row / -row

        # ---- action head on the VPU (depth-A contraction is tiny; overlaps MXU chain)
        wa = view("wa")                                       # (A, H)
        a_pre = view("ba")                                    # (1, H)
        for k in range(A):
            a_pre = a_pre + act[:, k:k + 1] * wa[k:k + 1, :]
        a = jnp.tanh(a_pre)                                   # (2, H)

        # ---- linear2 with pre-split weights: no concat([h, a]) relayout ----
        z = jnp.tanh(jnp.dot(h, view("w2h"), preferred_element_type=f32)
                     + jnp.dot(a, view("w2a"), preferred_element_type=f32)
                     + view("b2"))                            # (2, H)

        out_ref[...] = jnp.sum(z * view("wv"), axis=1, keepdims=True) + view("bv")

    flops = (2 * 7 * 16 * 32 + 2 * 96 * 32
             + 2 * NI * H + 4 * A * H + 8 * H * H + 4 * H)
    bytes_accessed = 4 * (total_rows * lane_w + 2 * NI + 2 * A + 2)
    vmem = pl.BlockSpec(memory_space=pltpu.MemorySpace.VMEM)
    return pl.pallas_call(
        kernel,
        out_shape=jax.ShapeDtypeStruct((2, 1), jnp.float32),
        in_specs=[vmem, vmem, vmem],
        out_specs=vmem,
        cost_estimate=pl.CostEstimate(flops=flops, transcendentals=6 * H + NI,
                                      bytes_accessed=bytes_accessed),
    )(inputs, actions, slab)


# ----------------------------------------------------------------------------
# Deterministic parameter init (PyTorch-style U(-1/sqrt(fan_in), 1/sqrt(fan_in)))
# ----------------------------------------------------------------------------
def _uniform(key, shape, bound):
    return jax.random.uniform(key, shape, jnp.float32, -bound, bound)


def init_params(key, hidden_size, num_inputs, num_actions):
    H, A = hidden_size, num_actions
    ks = jax.random.split(key, 16)
    p = {}
    p["conv1_w"] = _uniform(ks[0], (16, 2, 4), 1.0 / jnp.sqrt(8.0))
    p["conv1_b"] = _uniform(ks[1], (16,), 1.0 / jnp.sqrt(8.0))
    p["out1_w"] = _uniform(ks[2], (16, 48), 1.0 / jnp.sqrt(48.0))
    p["out1_b"] = _uniform(ks[3], (16,), 1.0 / jnp.sqrt(48.0))
    p["conv2_w"] = _uniform(ks[4], (16, 2, 4), 1.0 / jnp.sqrt(8.0))
    p["conv2_b"] = _uniform(ks[5], (16,), 1.0 / jnp.sqrt(8.0))
    p["out2_w"] = _uniform(ks[6], (16, 48), 1.0 / jnp.sqrt(48.0))
    p["out2_b"] = _uniform(ks[7], (16,), 1.0 / jnp.sqrt(48.0))
    p["linear1_w"] = _uniform(ks[8], (H, num_inputs), 1.0 / jnp.sqrt(num_inputs))
    p["linear1_b"] = _uniform(ks[9], (H,), 1.0 / jnp.sqrt(num_inputs))
    p["linear_action_w"] = _uniform(ks[10], (H, A), 1.0 / jnp.sqrt(A))
    p["linear_action_b"] = _uniform(ks[11], (H,), 1.0 / jnp.sqrt(A))
    p["linear2_w"] = _uniform(ks[12], (H, 2 * H), 1.0 / jnp.sqrt(2.0 * H))
    p["linear2_b"] = _uniform(ks[13], (H,), 1.0 / jnp.sqrt(2.0 * H))
    p["V_w"] = _uniform(ks[14], (1, H), 1.0 / jnp.sqrt(H)) * 0.1   # V scaled by 0.1
    p["V_b"] = _uniform(ks[15], (1,), 1.0 / jnp.sqrt(H)) * 0.1
    return p


# ----------------------------------------------------------------------------
# Pure-JAX reference (mirrors the PyTorch forward) for validation
# ----------------------------------------------------------------------------
def reference_forward(params, inputs, actions):
    def branch(x_slice, wc, bc, wo, bo):
        xc = x_slice.reshape(2, 8)                               # view(1, 2, 8) channels
        xpad = jnp.pad(xc, ((0, 0), (1, 1)))                     # (2, 10)
        cols = [jnp.sum(xpad[:, t:t + 4][None] * wc, axis=(1, 2)) + bc
                for t in range(7)]
        conv = jnp.maximum(jnp.stack(cols, axis=1), 0.0)         # (16, 7)
        pooled = jnp.max(conv[:, :6].reshape(16, 3, 2), axis=2)  # (16, 3)
        y = pooled.reshape(1, 48) @ wo.T + bo
        return y.reshape(2, 8)

    cnn1 = branch(inputs[:, 0:8], params["conv1_w"], params["conv1_b"],
                  params["out1_w"], params["out1_b"])
    cnn2 = branch(inputs[:, 8:16], params["conv2_w"], params["conv2_b"],
                  params["out2_w"], params["out2_b"])
    x = jnp.concatenate((cnn1, cnn2, inputs[:, 16:]), axis=1)
    mean = jnp.mean(x, axis=0, keepdims=True)
    var = jnp.mean((x - mean) ** 2, axis=0, keepdims=True)
    x = (x - mean) / jnp.sqrt(var + 1e-5)
    h = jnp.tanh(x @ params["linear1_w"].T + params["linear1_b"])
    a = jnp.tanh(actions @ params["linear_action_w"].T + params["linear_action_b"])
    z = jnp.tanh(jnp.concatenate((h, a), axis=1) @ params["linear2_w"].T
                 + params["linear2_b"])
    return z @ params["V_w"].T + params["V_b"]


if __name__ == "__main__":
    hidden_size, num_inputs, num_actions = 32, 20, 4
    key = jax.random.PRNGKey(0)
    kp, ki, ka = jax.random.split(key, 3)
    params = init_params(kp, hidden_size, num_inputs, num_actions)
    # Batch is fixed to 2 by the .view(2, 8) / .view(1, 2, 8) calls in forward().
    inputs = jax.random.normal(ki, (2, num_inputs), jnp.float32)
    actions = jax.random.normal(ka, (2, num_actions), jnp.float32)

    slab = pack_params(params, hidden_size)          # one-time lane-dense weight packing
    fwd = jax.jit(functools.partial(critic_forward), static_argnames=("hidden_size",))
    v = fwd(slab, inputs, actions, hidden_size=hidden_size)
    v = jax.block_until_ready(v)

    v_ref = reference_forward(params, inputs, actions)
    assert v.shape == (2, 1), v.shape
    assert jnp.allclose(v, v_ref, atol=1e-3, rtol=1e-3), (v, v_ref)
    print("KERNEL_OK")
</pallas_src>

<mosaic_0001>
module attributes {stable_mosaic.version = 11 : i64} {
  func.func @kernel(%arg0: memref<2x20xf32, #tpu.memory_space<vmem>>, %arg1: memref<2x4xf32, #tpu.memory_space<vmem>>, %arg2: memref<96x128xf32, #tpu.memory_space<vmem>>, %arg3: memref<2x1xf32, #tpu.memory_space<vmem>>) attributes {dimension_semantics = [], scalar_prefetch = 0 : i64, scratch_operands = 0 : i64, tpu.core_type = #tpu.core_type<tc>} {
    %c0 = arith.constant 0 : index
    %c0_0 = arith.constant 0 : index
    %0 = vector.load %arg0[%c0, %c0_0] : memref<2x20xf32, #tpu.memory_space<vmem>>, vector<2x20xf32>
    %c0_1 = arith.constant 0 : index
    %c0_2 = arith.constant 0 : index
    %1 = vector.load %arg1[%c0_1, %c0_2] : memref<2x4xf32, #tpu.memory_space<vmem>>, vector<2x4xf32>
    %2 = vector.extract_strided_slice %0 {offsets = [0, 0], sizes = [2, 16], strides = [1, 1]} : vector<2x20xf32> to vector<2x16xf32>
    %3 = tpu.transpose %2, [1, 0] : vector<2x16xf32> -> vector<16x2xf32>
    %4 = vector.extract_strided_slice %3 {offsets = [0, 0], sizes = [8, 2], strides = [1, 1]} : vector<16x2xf32> to vector<8x2xf32>
    %5 = vector.extract_strided_slice %3 {offsets = [8, 0], sizes = [8, 2], strides = [1, 1]} : vector<16x2xf32> to vector<8x2xf32>
    %6 = tpu.concatenate %4, %5 in 1 : vector<8x2xf32>, vector<8x2xf32> -> vector<8x4xf32>
    %cst = arith.constant 0.000000e+00 : f32
    %7 = vector.broadcast %cst : f32 to vector<1x4xf32>
    %8 = tpu.concatenate %7, %6, %7 in 0 : vector<1x4xf32>, vector<8x4xf32>, vector<1x4xf32> -> vector<10x4xf32>
    %9 = vector.extract_strided_slice %8 {offsets = [0, 0], sizes = [7, 4], strides = [1, 1]} : vector<10x4xf32> to vector<7x4xf32>
    %10 = vector.extract_strided_slice %8 {offsets = [1, 0], sizes = [7, 4], strides = [1, 1]} : vector<10x4xf32> to vector<7x4xf32>
    %11 = vector.extract_strided_slice %8 {offsets = [2, 0], sizes = [7, 4], strides = [1, 1]} : vector<10x4xf32> to vector<7x4xf32>
    %12 = vector.extract_strided_slice %8 {offsets = [3, 0], sizes = [7, 4], strides = [1, 1]} : vector<10x4xf32> to vector<7x4xf32>
    %13 = tpu.concatenate %9, %10, %11, %12 in 1 : vector<7x4xf32>, vector<7x4xf32>, vector<7x4xf32>, vector<7x4xf32> -> vector<7x16xf32>
    %c0_3 = arith.constant 0 : index
    %c96 = arith.constant 96 : index
    %14 = vector.load %arg2[%c0_3, %c96] : memref<96x128xf32, #tpu.memory_space<vmem>>, vector<16x32xf32>
    %cst_4 = arith.constant dense<0.000000e+00> : vector<7x32xf32>
    %15 = tpu.matmul %13, %14, %cst_4 {dimension_numbers = #tpu.dot_dimension_numbers<[1], [0], [0], [1], [0, 0, 1, 1], [], []>} : vector<7x16xf32>, vector<16x32xf32>, vector<7x32xf32> -> vector<7x32xf32>
    %c32 = arith.constant 32 : index
    %c96_5 = arith.constant 96 : index
    %16 = vector.load %arg2[%c32, %c96_5] : memref<96x128xf32, #tpu.memory_space<vmem>>, vector<1x32xf32>
    %17 = vector.broadcast %16 : vector<1x32xf32> to vector<7x32xf32>
    %18 = arith.addf %15, %17 : vector<7x32xf32>
    %cst_6 = arith.constant 0.000000e+00 : f32
    %19 = vector.broadcast %cst_6 : f32 to vector<7x32xf32>
    %20 = arith.maximumf %18, %19 : vector<7x32xf32>
    %21 = vector.extract_strided_slice %20 {offsets = [0, 0], sizes = [1, 32], strides = [1, 1]} : vector<7x32xf32> to vector<1x32xf32>
    %22 = vector.extract_strided_slice %20 {offsets = [1, 0], sizes = [1, 32], strides = [1, 1]} : vector<7x32xf32> to vector<1x32xf32>
    %23 = arith.maximumf %21, %22 : vector<1x32xf32>
    %24 = vector.extract_strided_slice %20 {offsets = [2, 0], sizes = [1, 32], strides = [1, 1]} : vector<7x32xf32> to vector<1x32xf32>
    %25 = vector.extract_strided_slice %20 {offsets = [3, 0], sizes = [1, 32], strides = [1, 1]} : vector<7x32xf32> to vector<1x32xf32>
    %26 = arith.maximumf %24, %25 : vector<1x32xf32>
    %27 = vector.extract_strided_slice %20 {offsets = [4, 0], sizes = [1, 32], strides = [1, 1]} : vector<7x32xf32> to vector<1x32xf32>
    %28 = vector.extract_strided_slice %20 {offsets = [5, 0], sizes = [1, 32], strides = [1, 1]} : vector<7x32xf32> to vector<1x32xf32>
    %29 = arith.maximumf %27, %28 : vector<1x32xf32>
    %30 = tpu.concatenate %23, %26, %29 in 1 : vector<1x32xf32>, vector<1x32xf32>, vector<1x32xf32> -> vector<1x96xf32>
    %c0_7 = arith.constant 0 : index
    %c0_8 = arith.constant 0 : index
    %31 = vector.load %arg2[%c0_7, %c0_8] : memref<96x128xf32, #tpu.memory_space<vmem>>, vector<96x32xf32>
    %cst_9 = arith.constant dense<0.000000e+00> : vector<1x32xf32>
    %32 = tpu.matmul %30, %31, %cst_9 {dimension_numbers = #tpu.dot_dimension_numbers<[1], [0], [0], [1], [0, 0, 1, 1], [], []>} : vector<1x96xf32>, vector<96x32xf32>, vector<1x32xf32> -> vector<1x32xf32>
    %c40 = arith.constant 40 : index
    %c32_10 = arith.constant 32 : index
    %33 = vector.load %arg2[%c40, %c32_10] : memref<96x128xf32, #tpu.memory_space<vmem>>, vector<1x32xf32>
    %34 = arith.addf %32, %33 : vector<1x32xf32>
    %35 = vector.extract_strided_slice %34 {offsets = [0, 0], sizes = [1, 16], strides = [1, 1]} : vector<1x32xf32> to vector<1x16xf32>
    %36 = vector.extract_strided_slice %34 {offsets = [0, 16], sizes = [1, 16], strides = [1, 1]} : vector<1x32xf32> to vector<1x16xf32>
    %37 = arith.subf %35, %36 : vector<1x16xf32>
    %cst_11 = arith.constant 5.000000e-01 : f32
    %38 = vector.broadcast %cst_11 : f32 to vector<1x16xf32>
    %39 = arith.mulf %38, %37 : vector<1x16xf32>
    %40 = arith.mulf %39, %39 : vector<1x16xf32>
    %cst_12 = arith.constant 9.99999974E-6 : f32
    %41 = vector.broadcast %cst_12 : f32 to vector<1x16xf32>
    %42 = arith.addf %40, %41 : vector<1x16xf32>
    %43 = math.rsqrt %42 : vector<1x16xf32>
    %44 = arith.mulf %39, %43 : vector<1x16xf32>
    %c16 = arith.constant 16 : index
    %c96_13 = arith.constant 96 : index
    %45 = vector.load %arg2[%c16, %c96_13] : memref<96x128xf32, #tpu.memory_space<vmem>>, vector<16x32xf32>
    %cst_14 = arith.constant dense<0.000000e+00> : vector<1x32xf32>
    %46 = tpu.matmul %44, %45, %cst_14 {dimension_numbers = #tpu.dot_dimension_numbers<[1], [0], [0], [1], [0, 0, 1, 1], [], []>} : vector<1x16xf32>, vector<16x32xf32>, vector<1x32xf32> -> vector<1x32xf32>
    %47 = vector.extract_strided_slice %0 {offsets = [0, 16], sizes = [1, 4], strides = [1, 1]} : vector<2x20xf32> to vector<1x4xf32>
    %48 = vector.extract_strided_slice %0 {offsets = [1, 16], sizes = [1, 4], strides = [1, 1]} : vector<2x20xf32> to vector<1x4xf32>
    %49 = arith.subf %47, %48 : vector<1x4xf32>
    %cst_15 = arith.constant 5.000000e-01 : f32
    %50 = vector.broadcast %cst_15 : f32 to vector<1x4xf32>
    %51 = arith.mulf %50, %49 : vector<1x4xf32>
    %52 = arith.mulf %51, %51 : vector<1x4xf32>
    %cst_16 = arith.constant 9.99999974E-6 : f32
    %53 = vector.broadcast %cst_16 : f32 to vector<1x4xf32>
    %54 = arith.addf %52, %53 : vector<1x4xf32>
    %55 = math.rsqrt %54 : vector<1x4xf32>
    %56 = arith.mulf %51, %55 : vector<1x4xf32>
    %c32_17 = arith.constant 32 : index
    %c32_18 = arith.constant 32 : index
    %57 = vector.load %arg2[%c32_17, %c32_18] : memref<96x128xf32, #tpu.memory_space<vmem>>, vector<4x32xf32>
    %cst_19 = arith.constant dense<0.000000e+00> : vector<1x32xf32>
    %58 = tpu.matmul %56, %57, %cst_19 {dimension_numbers = #tpu.dot_dimension_numbers<[1], [0], [0], [1], [0, 0, 1, 1], [], []>} : vector<1x4xf32>, vector<4x32xf32>, vector<1x32xf32> -> vector<1x32xf32>
    %59 = arith.addf %46, %58 : vector<1x32xf32>
    %60 = tpu.iota {dimensions = array<i32: 0>} : vector<2x1xi32>
    %61 = arith.sitofp %60 : vector<2x1xi32> to vector<2x1xf32>
    %cst_20 = arith.constant 2.000000e+00 : f32
    %62 = vector.broadcast %cst_20 : f32 to vector<2x1xf32>
    %63 = arith.mulf %62, %61 : vector<2x1xf32>
    %cst_21 = arith.constant 1.000000e+00 : f32
    %64 = vector.broadcast %cst_21 : f32 to vector<2x1xf32>
    %65 = arith.subf %64, %63 : vector<2x1xf32>
    %66 = vector.broadcast %65 : vector<2x1xf32> to vector<2x32xf32>
    %67 = vector.broadcast %59 : vector<1x32xf32> to vector<2x32xf32>
    %68 = arith.mulf %66, %67 : vector<2x32xf32>
    %c40_22 = arith.constant 40 : index
    %c64 = arith.constant 64 : index
    %69 = vector.load %arg2[%c40_22, %c64] : memref<96x128xf32, #tpu.memory_space<vmem>>, vector<1x32xf32>
    %70 = vector.broadcast %69 : vector<1x32xf32> to vector<2x32xf32>
    %71 = arith.addf %68, %70 : vector<2x32xf32>
    %72 = math.tanh %71 : vector<2x32xf32>
    %c32_23 = arith.constant 32 : index
    %c64_24 = arith.constant 64 : index
    %73 = vector.load %arg2[%c32_23, %c64_24] : memref<96x128xf32, #tpu.memory_space<vmem>>, vector<4x32xf32>
    %c40_25 = arith.constant 40 : index
    %c96_26 = arith.constant 96 : index
    %74 = vector.load %arg2[%c40_25, %c96_26] : memref<96x128xf32, #tpu.memory_space<vmem>>, vector<1x32xf32>
    %75 = vector.extract_strided_slice %1 {offsets = [0, 0], sizes = [2, 1], strides = [1, 1]} : vector<2x4xf32> to vector<2x1xf32>
    %76 = vector.extract_strided_slice %73 {offsets = [0, 0], sizes = [1, 32], strides = [1, 1]} : vector<4x32xf32> to vector<1x32xf32>
    %77 = vector.broadcast %75 : vector<2x1xf32> to vector<2x32xf32>
    %78 = vector.broadcast %76 : vector<1x32xf32> to vector<2x32xf32>
    %79 = arith.mulf %77, %78 : vector<2x32xf32>
    %80 = vector.broadcast %74 : vector<1x32xf32> to vector<2x32xf32>
    %81 = arith.addf %80, %79 : vector<2x32xf32>
    %82 = vector.extract_strided_slice %1 {offsets = [0, 1], sizes = [2, 1], strides = [1, 1]} : vector<2x4xf32> to vector<2x1xf32>
    %83 = vector.extract_strided_slice %73 {offsets = [1, 0], sizes = [1, 32], strides = [1, 1]} : vector<4x32xf32> to vector<1x32xf32>
    %84 = vector.broadcast %82 : vector<2x1xf32> to vector<2x32xf32>
    %85 = vector.broadcast %83 : vector<1x32xf32> to vector<2x32xf32>
    %86 = arith.mulf %84, %85 : vector<2x32xf32>
    %87 = arith.addf %81, %86 : vector<2x32xf32>
    %88 = vector.extract_strided_slice %1 {offsets = [0, 2], sizes = [2, 1], strides = [1, 1]} : vector<2x4xf32> to vector<2x1xf32>
    %89 = vector.extract_strided_slice %73 {offsets = [2, 0], sizes = [1, 32], strides = [1, 1]} : vector<4x32xf32> to vector<1x32xf32>
    %90 = vector.broadcast %88 : vector<2x1xf32> to vector<2x32xf32>
    %91 = vector.broadcast %89 : vector<1x32xf32> to vector<2x32xf32>
    %92 = arith.mulf %90, %91 : vector<2x32xf32>
    %93 = arith.addf %87, %92 : vector<2x32xf32>
    %94 = vector.extract_strided_slice %1 {offsets = [0, 3], sizes = [2, 1], strides = [1, 1]} : vector<2x4xf32> to vector<2x1xf32>
    %95 = vector.extract_strided_slice %73 {offsets = [3, 0], sizes = [1, 32], strides = [1, 1]} : vector<4x32xf32> to vector<1x32xf32>
    %96 = vector.broadcast %94 : vector<2x1xf32> to vector<2x32xf32>
    %97 = vector.broadcast %95 : vector<1x32xf32> to vector<2x32xf32>
    %98 = arith.mulf %96, %97 : vector<2x32xf32>
    %99 = arith.addf %93, %98 : vector<2x32xf32>
    %100 = math.tanh %99 : vector<2x32xf32>
    %c0_27 = arith.constant 0 : index
    %c32_28 = arith.constant 32 : index
    %101 = vector.load %arg2[%c0_27, %c32_28] : memref<96x128xf32, #tpu.memory_space<vmem>>, vector<32x32xf32>
    %cst_29 = arith.constant dense<0.000000e+00> : vector<2x32xf32>
    %102 = tpu.matmul %72, %101, %cst_29 {dimension_numbers = #tpu.dot_dimension_numbers<[1], [0], [0], [1], [0, 0, 1, 1], [], []>} : vector<2x32xf32>, vector<32x32xf32>, vector<2x32xf32> -> vector<2x32xf32>
    %c0_30 = arith.constant 0 : index
    %c64_31 = arith.constant 64 : index
    %103 = vector.load %arg2[%c0_30, %c64_31] : memref<96x128xf32, #tpu.memory_space<vmem>>, vector<32x32xf32>
    %cst_32 = arith.constant dense<0.000000e+00> : vector<2x32xf32>
    %104 = tpu.matmul %100, %103, %cst_32 {dimension_numbers = #tpu.dot_dimension_numbers<[1], [0], [0], [1], [0, 0, 1, 1], [], []>} : vector<2x32xf32>, vector<32x32xf32>, vector<2x32xf32> -> vector<2x32xf32>
    %105 = arith.addf %102, %104 : vector<2x32xf32>
    %c48 = arith.constant 48 : index
    %c32_33 = arith.constant 32 : index
    %106 = vector.load %arg2[%c48, %c32_33] : memref<96x128xf32, #tpu.memory_space<vmem>>, vector<1x32xf32>
    %107 = vector.broadcast %106 : vector<1x32xf32> to vector<2x32xf32>
    %108 = arith.addf %105, %107 : vector<2x32xf32>
    %109 = math.tanh %108 : vector<2x32xf32>
    %c48_34 = arith.constant 48 : index
    %c64_35 = arith.constant 64 : index
    %110 = vector.load %arg2[%c48_34, %c64_35] : memref<96x128xf32, #tpu.memory_space<vmem>>, vector<1x32xf32>
    %111 = vector.broadcast %110 : vector<1x32xf32> to vector<2x32xf32>
    %112 = arith.mulf %109, %111 : vector<2x32xf32>
    %cst_36 = arith.constant dense<0.000000e+00> : vector<2xf32>
    %113 = vector.multi_reduction <add>, %112, %cst_36 [1] : vector<2x32xf32> to vector<2xf32>
    %114 = vector.shape_cast %113 : vector<2xf32> to vector<2x1xf32>
    %c48_37 = arith.constant 48 : index
    %c96_38 = arith.constant 96 : index
    %115 = vector.load %arg2[%c48_37, %c96_38] : memref<96x128xf32, #tpu.memory_space<vmem>>, vector<1x1xf32>
    %116 = vector.broadcast %115 : vector<1x1xf32> to vector<2x1xf32>
    %117 = arith.addf %114, %116 : vector<2x1xf32>
    %c0_39 = arith.constant 0 : index
    %c0_40 = arith.constant 0 : index
    %118 = vector.load %arg3[%c0_39, %c0_40] : memref<2x1xf32, #tpu.memory_space<vmem>>, vector<2x1xf32>
    tpu.vector_store %arg3[%c0_39, %c0_40], %117 {strides = array<i32>} : memref<2x1xf32, #tpu.memory_space<vmem>>, vector<2x1xf32>,
    return
  }
}

</mosaic_0001>

<llo_original>
// kernel: critic_forward.1
$region0: #{critic_forward.1}
  #allocation0 [shape = 'u32[]', space=smem, size = 0x4, offset = 0x4, fixed_abs, tag = 'smem constant byte address 0x4 - core index']
  #allocation1 [shape = 'u32[144,128]{1,0:T(1,128)}', space=vmem, size = 0x12000, scoped, tag = 'internal scratch']
  %s0 = inlined_call_operand.hbm [shape: f32[2,20], index: 0, kind: input, shape index: {}]
  %s1 = inlined_call_operand.vmem [shape: f32[2,4], index: 1, kind: input, shape index: {}]
  %s2 = inlined_call_operand.hbm [shape: f32[96,128], index: 2, kind: input, shape index: {}]
  %s3 = inlined_call_operand.vmem [shape: f32[2,1], index: 3, kind: output, shape index: {}]
  %s4 = sld [smem:[#allocation0]]
  $region30: #{critic_forward.1} parent=0
    _
  %s6 = ssub.s32 1, %s4
  %s7 = scalar_select 0, %s6, %s4
  $region1: #{critic_forward.1} parent=0
    #allocation2 [shape = 'u8[1024]{0}', space=vmem, size = 0x400, scoped, tag = 'input window, operand 0, single buffered']
    #allocation3 [shape = 's32[1]{0}', space=sflag, size = 0x4, scoped, tag = 'scoped memory for critic_forward.1']
    #allocation4 [shape = 'u8[49152]{0}', space=vmem, size = 0xc000, scoped, tag = 'input window, operand 2, single buffered']
    #allocation5 [shape = 's32[1]{0}', space=sflag, size = 0x4, scoped, tag = 'scoped memory for critic_forward.1']
    %8 = vsyncpa [#allocation3], 0
    %9 = vsyncpa [#allocation5], 0
    // Predicated region
    $region2: #{critic_forward.1} parent=1 // pred_check
      _
    $region3: #{critic_forward.1} parent=1 // pred_check_branch
      %11 = sbr.rel (0) target = $region5
    $region4: #{critic_forward.1} parent=1 // pred_region
      %s13 = ssub.s32 32, 32
      %14 = vsyncadd [#allocation3], %s13
      %s16 = sshll.u32 [#allocation2], 4
      %s17 = int_to_ptr.vmem [resolvable:$true] %s16
      %19 = dma.hbm_to_vmem [thread:$0]  %s0, 32, %s17, [#allocation3]
    $region5: #{critic_forward.1} parent=1 // pred_fallthru
      _
    // Predicated region
    $region6: #{critic_forward.1} parent=1 // pred_check
      _
    $region7: #{critic_forward.1} parent=1 // pred_check_branch
      %21 = sbr.rel (0) target = $region9
    $region8: #{critic_forward.1} parent=1 // pred_region
      _
    $region9: #{critic_forward.1} parent=1 // pred_fallthru
      _
    // Predicated region
    $region10: #{critic_forward.1} parent=1 // pred_check
      _
    $region11: #{critic_forward.1} parent=1 // pred_check_branch
      %23 = sbr.rel (0) target = $region13
    $region12: #{critic_forward.1} parent=1 // pred_region
      %s25 = ssub.s32 1536, 1536
      %26 = vsyncadd [#allocation5], %s25
      %s27 = sshll.u32 [#allocation4], 4
      %s28 = int_to_ptr.vmem [resolvable:$true] %s27
      %33 = dma.hbm_to_vmem [thread:$0]  %s2, 1536, %s28, [#allocation5], 128, 128, 8
    $region13: #{critic_forward.1} parent=1 // pred_fallthru
      _
    // Predicated region
    $region14: #{critic_forward.1} parent=1 // pred_check
      _
    $region15: #{critic_forward.1} parent=1 // pred_check_branch
      %35 = sbr.rel (0) target = $region17
    $region16: #{critic_forward.1} parent=1 // pred_region
      %36 = dma.done [#allocation3], 32
    $region17: #{critic_forward.1} parent=1 // pred_fallthru
      _
    // Predicated region
    $region18: #{critic_forward.1} parent=1 // pred_check
      _
    $region19: #{critic_forward.1} parent=1 // pred_check_branch
      %38 = sbr.rel (0) target = $region21
    $region20: #{critic_forward.1} parent=1 // pred_region
      %39 = dma.done [#allocation5], 1536
    $region21: #{critic_forward.1} parent=1 // pred_fallthru
      _
    %v40 = vld [vmem:[#allocation2] sm:$0x3]
    %v41 = vld [vmem:[%s1] sm:$0x3]
    %42 = vxpose.xlu0.b32.start [1/16] %v40, 128
    %43 = vxpose.xlu0.b32.cont [2/16] 0.0, 128
    %44 = vxpose.xlu0.b32.cont [3/16] 0.0, 128
    %45 = vxpose.xlu0.b32.cont [4/16] 0.0, 128
    %46 = vxpose.xlu0.b32.cont [5/16] 0.0, 128
    %47 = vxpose.xlu0.b32.cont [6/16] 0.0, 128
    %48 = vxpose.xlu0.b32.cont [7/16] 0.0, 128
    %49 = vxpose.xlu0.b32.cont [8/16] 0.0, 128
    %50 = vxpose.xlu0.b32.cont [9/16] 0.0, 128
    %51 = vxpose.xlu0.b32.cont [10/16] 0.0, 128
    %52 = vxpose.xlu0.b32.cont [11/16] 0.0, 128
    %53 = vxpose.xlu0.b32.cont [12/16] 0.0, 128
    %54 = vxpose.xlu0.b32.cont [13/16] 0.0, 128
    %55 = vxpose.xlu0.b32.cont [14/16] 0.0, 128
    %56 = vxpose.xlu0.b32.cont [15/16] 0.0, 128
    %57 = vxpose.xlu0.b32.end [16/16] 0.0, 128
    %v58 = vpop.trf.xlu0
    %v59 = vpop.trf.xlu0
    %v60 = vpop.trf.xlu0
    %v61 = vpop.trf.xlu0
    %v62 = vpop.trf.xlu0
    %v63 = vpop.trf.xlu0
    %v64 = vpop.trf.xlu0
    %v65 = vpop.trf.xlu0
    %v66 = vpop.trf.xlu0
    %v67 = vpop.trf.xlu0
    %v68 = vpop.trf.xlu0
    %v69 = vpop.trf.xlu0
    %v70 = vpop.trf.xlu0
    %v71 = vpop.trf.xlu0
    %v72 = vpop.trf.xlu0
    %v73 = vpop.trf.xlu0
    %75 = vrot.lane.b32.xlu0 %v59, 2
    %v76 = vpop.permute.xlu0 %75
    %vm78 = vcmask 15360
    %v79 = vsel %vm78, %v58, %v76
    %v81 = vrot.slane %v79, 7
    %vm83 = vcmask 1040384
    %v84 = vsel %vm83, 0.0, %v81
    %v85 = vsel %vm83, %v81, 0.0
    %v87 = vrot.slane %v84, 1
    %88 = vrot.lane.b32.xlu0 %v87, 4
    %v89 = vpop.permute.xlu0 %88
    %vm92 = vcmask 1045504
    %v93 = vrot.slane %v84, 2
    %v94 = vrot.slane %v85, 2
    %v95 = vsel %vm92, %v93, %v94
    %96 = vrot.lane.b32.xlu0 %v95, 8
    %v97 = vpop.permute.xlu0 %96
    %vm99 = vcmask 1044480
    %v100 = vrot.slane %v84, 3
    %v101 = vrot.slane %v85, 3
    %v102 = vsel %vm99, %v100, %v101
    %103 = vrot.lane.b32.xlu0 %v102, 12
    %v104 = vpop.permute.xlu0 %103
    %vm106 = vcmask 31744
    %v107 = vsel %vm106, %v84, %v89
    %vm108 = vcmask 64512
    %v109 = vsel %vm108, %v107, %v97
    %vm110 = vcmask 97280
    %v111 = vsel %vm110, %v109, %v104
    %v112 = vld [vmem:[#allocation4] sm:$0xff]
    %v113 = vld [vmem:[#allocation4 + $0x8] sm:$0xff]
    %v114 = vld [vmem:[#allocation4 + $0x20] sm:$0x1]
    %v115 = vlaneseq
    %v116 = vshrl.u32 %v115, 7
    %v117 = vsub.s32 0, %v116
    %v118 = vrot.slane %v114, %v117
    %121 = vrot.lane.b32.xlu0 %v112, 32
    %v122 = vpop.permute.xlu0 %121
    %123 = vrot.lane.b32.xlu0 %v113, 32
    %v124 = vpop.permute.xlu0 %123
    %128 = vrot.lane.b32.xlu0 %v118, 32
    %v129 = vpop.permute.xlu0 %128
    %vm131 = vcmask 130048
    %v133 = vsel %vm131, %v111, 0
    %135 = vmatprep.subr.mxu0 0.0
    %136 = vmatpush1.msra.mxu0 0.0
    %137 = vmatprep.subr.mxu0 0.0
    %138 = vmatpush1.msra.mxu0 0.0
    %139 = vmatprep.subr.mxu0 0.0
    %140 = vmatpush1.msra.mxu0 0.0
    %141 = vmatprep.subr.mxu0 0.0
    %142 = vmatpush1.msra.mxu0 0.0
    %143 = vmatprep.subr.mxu0 0.0
    %144 = vmatpush1.msra.mxu0 0.0
    %145 = vmatprep.subr.mxu0 0.0
    %146 = vmatpush1.msra.mxu0 0.0
    %147 = vmatprep.subr.mxu0 0.0
    %148 = vmatpush1.msra.mxu0 0.0
    %149 = vmatprep.subr.mxu0 0.0
    %150 = vmatpush1.msra.mxu0 0.0
    %151 = vmatprep.subr.mxu0 0.0
    %152 = vmatpush1.msra.mxu0 0.0
    %153 = vmatprep.subr.mxu0 0.0
    %154 = vmatpush1.msra.mxu0 0.0
    %155 = vmatprep.subr.mxu0 0.0
    %156 = vmatpush1.msra.mxu0 0.0
    %157 = vmatprep.subr.mxu0 0.0
    %158 = vmatpush1.msra.mxu0 0.0
    %159 = vmatprep.subr.mxu0 0.0
    %160 = vmatpush1.msra.mxu0 0.0
    %161 = vmatprep.subr.mxu0 0.0
    %162 = vmatpush1.msra.mxu0 0.0
    %163 = vmatprep.subr.mxu0 0.0
    %164 = vmatpush1.msra.mxu0 %v124
    %165 = vmatprep.subr.mxu0 0.0
    %166 = vmatpush1.msra.mxu0 %v122
    %167 = vmatprep.subr.mxu0 0.0
    %168 = vmatpush2.msra.mxu0 0.0
    %169 = vmatprep.subr.mxu0 0.0
    %170 = vmatpush2.msra.mxu0 0.0
    %171 = vmatprep.subr.mxu0 0.0
    %172 = vmatpush2.msra.mxu0 0.0
    %173 = vmatprep.subr.mxu0 0.0
    %174 = vmatpush2.msra.mxu0 0.0
    %175 = vmatprep.subr.mxu0 0.0
    %176 = vmatpush2.msra.mxu0 0.0
    %177 = vmatprep.subr.mxu0 0.0
    %178 = vmatpush2.msra.mxu0 0.0
    %179 = vmatprep.subr.mxu0 0.0
    %180 = vmatpush2.msra.mxu0 0.0
    %181 = vmatprep.subr.mxu0 0.0
    %182 = vmatpush2.msra.mxu0 0.0
    %183 = vmatprep.subr.mxu0 0.0
    %184 = vmatpush2.msra.mxu0 0.0
    %185 = vmatprep.subr.mxu0 0.0
    %186 = vmatpush2.msra.mxu0 0.0
    %187 = vmatprep.subr.mxu0 0.0
    %188 = vmatpush2.msra.mxu0 0.0
    %189 = vmatprep.subr.mxu0 0.0
    %190 = vmatpush2.msra.mxu0 0.0
    %191 = vmatprep.subr.mxu0 0.0
    %192 = vmatpush2.msra.mxu0 0.0
    %193 = vmatprep.subr.mxu0 0.0
    %194 = vmatpush2.msra.mxu0 0.0
    %195 = vmatprep.subr.mxu0 0.0
    %196 = vmatpush2.msra.mxu0 0.0
    %197 = vmatprep.subr.mxu0 0.0
    %198 = vmatpush2.msra.mxu0 0.0
    %199 = vmatprep.mubr.f32.mxu0 0.0
    %200 = vmatmul.mubr.f32.gmra.mxu0 %v133
    %v201 = vpop.f32.mrf.mxu0
    %v202 = vadd.f32 %v129, %v201
    %v203 = vpop.f32.mrf.mxu0
    %204 = vdwg.mxu0
    %v205 = vmax.f32 %v202, 0.0
    %v207 = vrot.slane %v205, 1
    %v209 = vmax.f32 %v205, %v207
    %v211 = vrot.slane %v209, 2
    %212 = vrot.lane.b32.xlu0 %v211, 32
    %v213 = vpop.permute.xlu0 %212
    %v215 = vrot.slane %v209, 4
    %216 = vrot.lane.b32.xlu0 %v215, 64
    %v217 = vpop.permute.xlu0 %216
    %vm219 = vcmask 261120
    %v220 = vsel %vm219, %v209, %v213
    %vm221 = vcmask 523264
    %v222 = vsel %vm221, %v220, %v217
    %v223 = vld [vmem:[#allocation4] sm:$0xff]
    %v224 = vld [vmem:[#allocation4 + $0x8] sm:$0xff]
    %v225 = vld [vmem:[#allocation4 + $0x10] sm:$0xff]
    %v226 = vld [vmem:[#allocation4 + $0x18] sm:$0xff]
    %v227 = vld [vmem:[#allocation4 + $0x20] sm:$0xff]
    %v228 = vld [vmem:[#allocation4 + $0x28] sm:$0xff]
    %v229 = vld [vmem:[#allocation4 + $0x30] sm:$0xff]
    %v230 = vld [vmem:[#allocation4 + $0x38] sm:$0xff]
    %v231 = vld [vmem:[#allocation4 + $0x40] sm:$0xff]
    %v232 = vld [vmem:[#allocation4 + $0x48] sm:$0xff]
    %v233 = vld [vmem:[#allocation4 + $0x50] sm:$0xff]
    %v234 = vld [vmem:[#allocation4 + $0x58] sm:$0xff]
    %v235 = vld [vmem:[#allocation4 + $0x28] sm:$0x1]
    %237 = vrot.lane.b32.xlu0 %v235, 96
    %v238 = vpop.permute.xlu0 %237
    %vm240 = vcmask 785408
    %v242 = vsel %vm240, %v222, 0
    %244 = vmatprep.subr.mxu0 0.0
    %245 = vmatpush1.msra.mxu0 0.0
    %246 = vmatprep.subr.mxu0 0.0
    %247 = vmatpush1.msra.mxu0 0.0
    %248 = vmatprep.subr.mxu0 0.0
    %249 = vmatpush1.msra.mxu0 0.0
    %250 = vmatprep.subr.mxu0 0.0
    %251 = vmatpush1.msra.mxu0 0.0
    %252 = vmatprep.subr.mxu0 0.0
    %253 = vmatpush1.msra.mxu0 %v234
    %254 = vmatprep.subr.mxu0 0.0
    %255 = vmatpush1.msra.mxu0 %v233
    %256 = vmatprep.subr.mxu0 0.0
    %257 = vmatpush1.msra.mxu0 %v232
    %258 = vmatprep.subr.mxu0 0.0
    %259 = vmatpush1.msra.mxu0 %v231
    %260 = vmatprep.subr.mxu0 0.0
    %261 = vmatpush1.msra.mxu0 %v230
    %262 = vmatprep.subr.mxu0 0.0
    %263 = vmatpush1.msra.mxu0 %v229
    %264 = vmatprep.subr.mxu0 0.0
    %265 = vmatpush1.msra.mxu0 %v228
    %266 = vmatprep.subr.mxu0 0.0
    %267 = vmatpush1.msra.mxu0 %v227
    %268 = vmatprep.subr.mxu0 0.0
    %269 = vmatpush1.msra.mxu0 %v226
    %270 = vmatprep.subr.mxu0 0.0
    %271 = vmatpush1.msra.mxu0 %v225
    %272 = vmatprep.subr.mxu0 0.0
    %273 = vmatpush1.msra.mxu0 %v224
    %274 = vmatprep.subr.mxu0 0.0
    %275 = vmatpush1.msra.mxu0 %v223
    %276 = vmatprep.subr.mxu0 0.0
    %277 = vmatpush2.msra.mxu0 0.0
    %278 = vmatprep.subr.mxu0 0.0
    %279 = vmatpush2.msra.mxu0 0.0
    %280 = vmatprep.subr.mxu0 0.0
    %281 = vmatpush2.msra.mxu0 0.0
    %282 = vmatprep.subr.mxu0 0.0
    %283 = vmatpush2.msra.mxu0 0.0
    %284 = vmatprep.subr.mxu0 0.0
    %285 = vmatpush2.msra.mxu0 0.0
    %286 = vmatprep.subr.mxu0 0.0
    %287 = vmatpush2.msra.mxu0 0.0
    %288 = vmatprep.subr.mxu0 0.0
    %289 = vmatpush2.msra.mxu0 0.0
    %290 = vmatprep.subr.mxu0 0.0
    %291 = vmatpush2.msra.mxu0 0.0
    %292 = vmatprep.subr.mxu0 0.0
    %293 = vmatpush2.msra.mxu0 0.0
    %294 = vmatprep.subr.mxu0 0.0
    %295 = vmatpush2.msra.mxu0 0.0
    %296 = vmatprep.subr.mxu0 0.0
    %297 = vmatpush2.msra.mxu0 0.0
    %298 = vmatprep.subr.mxu0 0.0
    %299 = vmatpush2.msra.mxu0 0.0
    %300 = vmatprep.subr.mxu0 0.0
    %301 = vmatpush2.msra.mxu0 0.0
    %302 = vmatprep.subr.mxu0 0.0
    %303 = vmatpush2.msra.mxu0 0.0
    %304 = vmatprep.subr.mxu0 0.0
    %305 = vmatpush2.msra.mxu0 0.0
    %306 = vmatprep.subr.mxu0 0.0
    %307 = vmatpush2.msra.mxu0 0.0
    %308 = vmatprep.mubr.f32.mxu0 0.0
    %309 = vmatmul.mubr.f32.gmra.mxu0 %v242
    %v310 = vpop.f32.mrf.mxu0
    %v311 = vadd.f32 %v238, %v310
    %v312 = vpop.f32.mrf.mxu0
    %313 = vdwg.mxu0
    %315 = vrot.lane.b32.xlu0 %v311, 112
    %v316 = vpop.permute.xlu0 %315
    %v318 = vsub.f32 %v311, %v316
    %v319 = vmul.f32 %v318, 0.5
    %v320 = vmul.f32 %v319, %v319
    %v321 = vadd.f32 %v320, 1e-05
    %v322 = vrsqrt.pop %v321
    %v323 = vmul.f32 %v319, %v322
    %v324 = vld [vmem:[#allocation4 + $0x10] sm:$0xff]
    %v325 = vld [vmem:[#allocation4 + $0x18] sm:$0xff]
    %v327 = vrot.slane %v40, 1
    %v329 = vsub.f32 %v40, %v327
    %v330 = vmul.f32 %v329, 0.5
    %v331 = vmul.f32 %v330, %v330
    %v332 = vadd.f32 %v331, 1e-05
    %v333 = vrsqrt.pop %v332
    %v334 = vmul.f32 %v330, %v333
    %v335 = vld [vmem:[#allocation4 + $0x20] sm:$0xf]
    %337 = vrot.lane.b32.xlu0 %v334, 112
    %v338 = vpop.permute.xlu0 %337
    %340 = vrot.lane.b32.xlu0 %v335, 96
    %v341 = vpop.permute.xlu0 %340
    %v342 = vsel %vm106, %v338, 0
    %vm344 = vcmask 1043456
    %v345 = vsel %vm344, %v341, 0
    %347 = vmatprep.subr.mxu0 0.0
    %348 = vmatpush1.msra.mxu0 0.0
    %349 = vmatprep.subr.mxu0 0.0
    %350 = vmatpush1.msra.mxu0 0.0
    %351 = vmatprep.subr.mxu0 0.0
    %352 = vmatpush1.msra.mxu0 0.0
    %353 = vmatprep.subr.mxu0 0.0
    %354 = vmatpush1.msra.mxu0 0.0
    %355 = vmatprep.subr.mxu0 0.0
    %356 = vmatpush1.msra.mxu0 0.0
    %357 = vmatprep.subr.mxu0 0.0
    %358 = vmatpush1.msra.mxu0 0.0
    %359 = vmatprep.subr.mxu0 0.0
    %360 = vmatpush1.msra.mxu0 0.0
    %361 = vmatprep.subr.mxu0 0.0
    %362 = vmatpush1.msra.mxu0 0.0
    %363 = vmatprep.subr.mxu0 0.0
    %364 = vmatpush1.msra.mxu0 0.0
    %365 = vmatprep.subr.mxu0 0.0
    %366 = vmatpush1.msra.mxu0 0.0
    %367 = vmatprep.subr.mxu0 0.0
    %368 = vmatpush1.msra.mxu0 0.0
    %369 = vmatprep.subr.mxu0 0.0
    %370 = vmatpush1.msra.mxu0 0.0
    %371 = vmatprep.subr.mxu0 0.0
    %372 = vmatpush1.msra.mxu0 0.0
    %373 = vmatprep.subr.mxu0 0.0
    %374 = vmatpush1.msra.mxu0 0.0
    %375 = vmatprep.subr.mxu0 0.0
    %376 = vmatpush1.msra.mxu0 0.0
    %377 = vmatprep.subr.mxu0 0.0
    %378 = vmatpush1.msra.mxu0 %v345
    %379 = vmatprep.subr.mxu0 0.0
    %380 = vmatpush2.msra.mxu0 0.0
    %381 = vmatprep.subr.mxu0 0.0
    %382 = vmatpush2.msra.mxu0 0.0
    %383 = vmatprep.subr.mxu0 0.0
    %384 = vmatpush2.msra.mxu0 0.0
    %385 = vmatprep.subr.mxu0 0.0
    %386 = vmatpush2.msra.mxu0 0.0
    %387 = vmatprep.subr.mxu0 0.0
    %388 = vmatpush2.msra.mxu0 0.0
    %389 = vmatprep.subr.mxu0 0.0
    %390 = vmatpush2.msra.mxu0 0.0
    %391 = vmatprep.subr.mxu0 0.0
    %392 = vmatpush2.msra.mxu0 0.0
    %393 = vmatprep.subr.mxu0 0.0
    %394 = vmatpush2.msra.mxu0 0.0
    %395 = vmatprep.subr.mxu0 0.0
    %396 = vmatpush2.msra.mxu0 0.0
    %397 = vmatprep.subr.mxu0 0.0
    %398 = vmatpush2.msra.mxu0 0.0
    %399 = vmatprep.subr.mxu0 0.0
    %400 = vmatpush2.msra.mxu0 0.0
    %401 = vmatprep.subr.mxu0 0.0
    %402 = vmatpush2.msra.mxu0 0.0
    %403 = vmatprep.subr.mxu0 0.0
    %404 = vmatpush2.msra.mxu0 0.0
    %405 = vmatprep.subr.mxu0 0.0
    %406 = vmatpush2.msra.mxu0 0.0
    %407 = vmatprep.subr.mxu0 0.0
    %408 = vmatpush2.msra.mxu0 0.0
    %409 = vmatprep.subr.mxu0 0.0
    %410 = vmatpush2.msra.mxu0 0.0
    %411 = vmatprep.mubr.f32.mxu0 0.0
    %412 = vmatmul.mubr.f32.gmra.mxu0 %v342
    %v413 = vpop.f32.mrf.mxu0
    %v414 = vadd.f32 0.0, %v413
    %v415 = vpop.f32.mrf.mxu0
    %416 = vdwg.mxu0
    %419 = vrot.lane.b32.xlu0 %v324, 32
    %v420 = vpop.permute.xlu0 %419
    %421 = vrot.lane.b32.xlu0 %v325, 32
    %v422 = vpop.permute.xlu0 %421
    %v426 = vsel %vm131, %v323, 0
    %428 = vmatprep.subr.mxu0 0.0
    %429 = vmatpush1.msra.mxu0 0.0
    %430 = vmatprep.subr.mxu0 0.0
    %431 = vmatpush1.msra.mxu0 0.0
    %432 = vmatprep.subr.mxu0 0.0
    %433 = vmatpush1.msra.mxu0 0.0
    %434 = vmatprep.subr.mxu0 0.0
    %435 = vmatpush1.msra.mxu0 0.0
    %436 = vmatprep.subr.mxu0 0.0
    %437 = vmatpush1.msra.mxu0 0.0
    %438 = vmatprep.subr.mxu0 0.0
    %439 = vmatpush1.msra.mxu0 0.0
    %440 = vmatprep.subr.mxu0 0.0
    %441 = vmatpush1.msra.mxu0 0.0
    %442 = vmatprep.subr.mxu0 0.0
    %443 = vmatpush1.msra.mxu0 0.0
    %444 = vmatprep.subr.mxu0 0.0
    %445 = vmatpush1.msra.mxu0 0.0
    %446 = vmatprep.subr.mxu0 0.0
    %447 = vmatpush1.msra.mxu0 0.0
    %448 = vmatprep.subr.mxu0 0.0
    %449 = vmatpush1.msra.mxu0 0.0
    %450 = vmatprep.subr.mxu0 0.0
    %451 = vmatpush1.msra.mxu0 0.0
    %452 = vmatprep.subr.mxu0 0.0
    %453 = vmatpush1.msra.mxu0 0.0
    %454 = vmatprep.subr.mxu0 0.0
    %455 = vmatpush1.msra.mxu0 0.0
    %456 = vmatprep.subr.mxu0 0.0
    %457 = vmatpush1.msra.mxu0 %v422
    %458 = vmatprep.subr.mxu0 0.0
    %459 = vmatpush1.msra.mxu0 %v420
    %460 = vmatprep.subr.mxu0 0.0
    %461 = vmatpush2.msra.mxu0 0.0
    %462 = vmatprep.subr.mxu0 0.0
    %463 = vmatpush2.msra.mxu0 0.0
    %464 = vmatprep.subr.mxu0 0.0
    %465 = vmatpush2.msra.mxu0 0.0
    %466 = vmatprep.subr.mxu0 0.0
    %467 = vmatpush2.msra.mxu0 0.0
    %468 = vmatprep.subr.mxu0 0.0
    %469 = vmatpush2.msra.mxu0 0.0
    %470 = vmatprep.subr.mxu0 0.0
    %471 = vmatpush2.msra.mxu0 0.0
    %472 = vmatprep.subr.mxu0 0.0
    %473 = vmatpush2.msra.mxu0 0.0
    %474 = vmatprep.subr.mxu0 0.0
    %475 = vmatpush2.msra.mxu0 0.0
    %476 = vmatprep.subr.mxu0 0.0
    %477 = vmatpush2.msra.mxu0 0.0
    %478 = vmatprep.subr.mxu0 0.0
    %479 = vmatpush2.msra.mxu0 0.0
    %480 = vmatprep.subr.mxu0 0.0
    %481 = vmatpush2.msra.mxu0 0.0
    %482 = vmatprep.subr.mxu0 0.0
    %483 = vmatpush2.msra.mxu0 0.0
    %484 = vmatprep.subr.mxu0 0.0
    %485 = vmatpush2.msra.mxu0 0.0
    %486 = vmatprep.subr.mxu0 0.0
    %487 = vmatpush2.msra.mxu0 0.0
    %488 = vmatprep.subr.mxu0 0.0
    %489 = vmatpush2.msra.mxu0 0.0
    %490 = vmatprep.subr.mxu0 0.0
    %491 = vmatpush2.msra.mxu0 0.0
    %492 = vmatprep.mubr.f32.mxu0 0.0
    %493 = vmatmul.mubr.f32.gmra.mxu0 %v426
    %v494 = vpop.f32.mrf.mxu0
    %v495 = vadd.f32 %v414, %v494
    %v496 = vpop.f32.mrf.mxu0
    %497 = vdwg.mxu0
    %v498 = vlaneseq
    %v499 = vshrl.u32 %v498, 7
    %v500 = vcvt.s32.f32 %v499
    %v501 = vmul.f32 %v500, 2.0
    %v502 = vsub.f32 1.0, %v501
    %v503 = vlaneseq
    %v504 = vshrl.u32 %v503, 7
    %v505 = vsub.s32 0, %v504
    %v506 = vrot.slane %v495, %v505
    %v507 = vmul.f32 %v502, %v506
    %v508 = vlaneseq
    %v509 = vshrl.u32 %v508, 7
    %v510 = vsub.s32 0, %v509
    %v511 = vrot.slane %v235, %v510
    %513 = vrot.lane.b32.xlu0 %v511, 64
    %v514 = vpop.permute.xlu0 %513
    %v516 = vadd.f32 %v507, %v514
    %v517 = vtanh.pop %v516
    %519 = vset.pattern.permute.xlu0 0
    %520 = vperm.xlu0 %519, %v41
    %v521 = vpop.permute.xlu0 %520
    %v523 = vlaneseq
    %v524 = vshrl.u32 %v523, 7
    %v525 = vsub.s32 0, %v524
    %v526 = vrot.slane %v335, %v525
    %v527 = vmul.f32 %v521, %v526
    %529 = vrot.lane.b32.xlu0 %v527, 32
    %v530 = vpop.permute.xlu0 %529
    %v532 = vadd.f32 %v511, %v530
    %533 = vset.pattern.permute.xlu0 1
    %534 = vperm.xlu0 %533, %v41
    %v535 = vpop.permute.xlu0 %534
    %v537 = vlaneseq
    %v538 = vshrl.u32 %v537, 7
    %v539 = vsub.s32 1, %v538
    %v540 = vrot.slane %v335, %v539
    %v541 = vmul.f32 %v535, %v540
    %543 = vrot.lane.b32.xlu0 %v541, 32
    %v544 = vpop.permute.xlu0 %543
    %v546 = vadd.f32 %v532, %v544
    %547 = vset.pattern.permute.xlu0 2
    %548 = vperm.xlu0 %547, %v41
    %v549 = vpop.permute.xlu0 %548
    %v551 = vlaneseq
    %v552 = vshrl.u32 %v551, 7
    %v553 = vsub.s32 2, %v552
    %v554 = vrot.slane %v335, %v553
    %v555 = vmul.f32 %v549, %v554
    %557 = vrot.lane.b32.xlu0 %v555, 32
    %v558 = vpop.permute.xlu0 %557
    %v560 = vadd.f32 %v546, %v558
    %561 = vset.pattern.permute.xlu0 3
    %562 = vperm.xlu0 %561, %v41
    %v563 = vpop.permute.xlu0 %562
    %v565 = vlaneseq
    %v566 = vshrl.u32 %v565, 7
    %v567 = vsub.s32 3, %v566
    %v568 = vrot.slane %v335, %v567
    %v569 = vmul.f32 %v563, %v568
    %571 = vrot.lane.b32.xlu0 %v569, 32
    %v572 = vpop.permute.xlu0 %571
    %v574 = vadd.f32 %v560, %v572
    %v575 = vtanh.pop %v574
    %v576 = vld [vmem:[#allocation4] sm:$0xff]
    %v577 = vld [vmem:[#allocation4 + $0x8] sm:$0xff]
    %579 = vrot.lane.b32.xlu0 %v575, 32
    %v580 = vpop.permute.xlu0 %579
    %583 = vrot.lane.b32.xlu0 %v576, 64
    %v584 = vpop.permute.xlu0 %583
    %585 = vrot.lane.b32.xlu0 %v577, 64
    %v586 = vpop.permute.xlu0 %585
    %587 = vrot.lane.b32.xlu0 %v324, 64
    %v588 = vpop.permute.xlu0 %587
    %589 = vrot.lane.b32.xlu0 %v325, 64
    %v590 = vpop.permute.xlu0 %589
    %v595 = vsel %vm219, %v580, 0
    %597 = vmatprep.subr.mxu0 0.0
    %598 = vmatpush1.msra.mxu0 0.0
    %599 = vmatprep.subr.mxu0 0.0
    %600 = vmatpush1.msra.mxu0 0.0
    %601 = vmatprep.subr.mxu0 0.0
    %602 = vmatpush1.msra.mxu0 0.0
    %603 = vmatprep.subr.mxu0 0.0
    %604 = vmatpush1.msra.mxu0 0.0
    %605 = vmatprep.subr.mxu0 0.0
    %606 = vmatpush1.msra.mxu0 0.0
    %607 = vmatprep.subr.mxu0 0.0
    %608 = vmatpush1.msra.mxu0 0.0
    %609 = vmatprep.subr.mxu0 0.0
    %610 = vmatpush1.msra.mxu0 0.0
    %611 = vmatprep.subr.mxu0 0.0
    %612 = vmatpush1.msra.mxu0 0.0
    %613 = vmatprep.subr.mxu0 0.0
    %614 = vmatpush1.msra.mxu0 0.0
    %615 = vmatprep.subr.mxu0 0.0
    %616 = vmatpush1.msra.mxu0 0.0
    %617 = vmatprep.subr.mxu0 0.0
    %618 = vmatpush1.msra.mxu0 0.0
    %619 = vmatprep.subr.mxu0 0.0
    %620 = vmatpush1.msra.mxu0 0.0
    %621 = vmatprep.subr.mxu0 0.0
    %622 = vmatpush1.msra.mxu0 %v590
    %623 = vmatprep.subr.mxu0 0.0
    %624 = vmatpush1.msra.mxu0 %v588
    %625 = vmatprep.subr.mxu0 0.0
    %626 = vmatpush1.msra.mxu0 %v586
    %627 = vmatprep.subr.mxu0 0.0
    %628 = vmatpush1.msra.mxu0 %v584
    %629 = vmatprep.subr.mxu0 0.0
    %630 = vmatpush2.msra.mxu0 0.0
    %631 = vmatprep.subr.mxu0 0.0
    %632 = vmatpush2.msra.mxu0 0.0
    %633 = vmatprep.subr.mxu0 0.0
    %634 = vmatpush2.msra.mxu0 0.0
    %635 = vmatprep.subr.mxu0 0.0
    %636 = vmatpush2.msra.mxu0 0.0
    %637 = vmatprep.subr.mxu0 0.0
    %638 = vmatpush2.msra.mxu0 0.0
    %639 = vmatprep.subr.mxu0 0.0
    %640 = vmatpush2.msra.mxu0 0.0
    %641 = vmatprep.subr.mxu0 0.0
    %642 = vmatpush2.msra.mxu0 0.0
    %643 = vmatprep.subr.mxu0 0.0
    %644 = vmatpush2.msra.mxu0 0.0
    %645 = vmatprep.subr.mxu0 0.0
    %646 = vmatpush2.msra.mxu0 0.0
    %647 = vmatprep.subr.mxu0 0.0
    %648 = vmatpush2.msra.mxu0 0.0
    %649 = vmatprep.subr.mxu0 0.0
    %650 = vmatpush2.msra.mxu0 0.0
    %651 = vmatprep.subr.mxu0 0.0
    %652 = vmatpush2.msra.mxu0 0.0
    %653 = vmatprep.subr.mxu0 0.0
    %654 = vmatpush2.msra.mxu0 0.0
    %655 = vmatprep.subr.mxu0 0.0
    %656 = vmatpush2.msra.mxu0 0.0
    %657 = vmatprep.subr.mxu0 0.0
    %658 = vmatpush2.msra.mxu0 0.0
    %659 = vmatprep.subr.mxu0 0.0
    %660 = vmatpush2.msra.mxu0 0.0
    %661 = vmatprep.mubr.f32.mxu0 0.0
    %662 = vmatmul.mubr.f32.gmra.mxu0 %v595
    %v663 = vpop.f32.mrf.mxu0
    %v664 = vadd.f32 0.0, %v663
    %v665 = vpop.f32.mrf.mxu0
    %666 = vdwg.mxu0
    %667 = vrot.lane.b32.xlu0 %v576, 96
    %v668 = vpop.permute.xlu0 %667
    %669 = vrot.lane.b32.xlu0 %v577, 96
    %v670 = vpop.permute.xlu0 %669
    %671 = vrot.lane.b32.xlu0 %v324, 96
    %v672 = vpop.permute.xlu0 %671
    %673 = vrot.lane.b32.xlu0 %v325, 96
    %v674 = vpop.permute.xlu0 %673
    %v680 = vsel %vm219, %v517, 0
    %682 = vmatprep.subr.mxu0 0.0
    %683 = vmatpush1.msra.mxu0 0.0
    %684 = vmatprep.subr.mxu0 0.0
    %685 = vmatpush1.msra.mxu0 0.0
    %686 = vmatprep.subr.mxu0 0.0
    %687 = vmatpush1.msra.mxu0 0.0
    %688 = vmatprep.subr.mxu0 0.0
    %689 = vmatpush1.msra.mxu0 0.0
    %690 = vmatprep.subr.mxu0 0.0
    %691 = vmatpush1.msra.mxu0 0.0
    %692 = vmatprep.subr.mxu0 0.0
    %693 = vmatpush1.msra.mxu0 0.0
    %694 = vmatprep.subr.mxu0 0.0
    %695 = vmatpush1.msra.mxu0 0.0
    %696 = vmatprep.subr.mxu0 0.0
    %697 = vmatpush1.msra.mxu0 0.0
    %698 = vmatprep.subr.mxu0 0.0
    %699 = vmatpush1.msra.mxu0 0.0
    %700 = vmatprep.subr.mxu0 0.0
    %701 = vmatpush1.msra.mxu0 0.0
    %702 = vmatprep.subr.mxu0 0.0
    %703 = vmatpush1.msra.mxu0 0.0
    %704 = vmatprep.subr.mxu0 0.0
    %705 = vmatpush1.msra.mxu0 0.0
    %706 = vmatprep.subr.mxu0 0.0
    %707 = vmatpush1.msra.mxu0 %v674
    %708 = vmatprep.subr.mxu0 0.0
    %709 = vmatpush1.msra.mxu0 %v672
    %710 = vmatprep.subr.mxu0 0.0
    %711 = vmatpush1.msra.mxu0 %v670
    %712 = vmatprep.subr.mxu0 0.0
    %713 = vmatpush1.msra.mxu0 %v668
    %714 = vmatprep.subr.mxu0 0.0
    %715 = vmatpush2.msra.mxu0 0.0
    %716 = vmatprep.subr.mxu0 0.0
    %717 = vmatpush2.msra.mxu0 0.0
    %718 = vmatprep.subr.mxu0 0.0
    %719 = vmatpush2.msra.mxu0 0.0
    %720 = vmatprep.subr.mxu0 0.0
    %721 = vmatpush2.msra.mxu0 0.0
    %722 = vmatprep.subr.mxu0 0.0
    %723 = vmatpush2.msra.mxu0 0.0
    %724 = vmatprep.subr.mxu0 0.0
    %725 = vmatpush2.msra.mxu0 0.0
    %726 = vmatprep.subr.mxu0 0.0
    %727 = vmatpush2.msra.mxu0 0.0
    %728 = vmatprep.subr.mxu0 0.0
    %729 = vmatpush2.msra.mxu0 0.0
    %730 = vmatprep.subr.mxu0 0.0
    %731 = vmatpush2.msra.mxu0 0.0
    %732 = vmatprep.subr.mxu0 0.0
    %733 = vmatpush2.msra.mxu0 0.0
    %734 = vmatprep.subr.mxu0 0.0
    %735 = vmatpush2.msra.mxu0 0.0
    %736 = vmatprep.subr.mxu0 0.0
    %737 = vmatpush2.msra.mxu0 0.0
    %738 = vmatprep.subr.mxu0 0.0
    %739 = vmatpush2.msra.mxu0 0.0
    %740 = vmatprep.subr.mxu0 0.0
    %741 = vmatpush2.msra.mxu0 0.0
    %742 = vmatprep.subr.mxu0 0.0
    %743 = vmatpush2.msra.mxu0 0.0
    %744 = vmatprep.subr.mxu0 0.0
    %745 = vmatpush2.msra.mxu0 0.0
    %746 = vmatprep.mubr.f32.mxu0 0.0
    %747 = vmatmul.mubr.f32.gmra.mxu0 %v680
    %v748 = vpop.f32.mrf.mxu0
    %v749 = vadd.f32 %v664, %v748
    %v750 = vpop.f32.mrf.mxu0
    %751 = vdwg.mxu0
    %v752 = vld [vmem:[#allocation4 + $0x30] sm:$0x1]
    %v753 = vlaneseq
    %v754 = vshrl.u32 %v753, 7
    %v755 = vsub.s32 0, %v754
    %v756 = vrot.slane %v752, %v755
    %758 = vrot.lane.b32.xlu0 %v756, 96
    %v759 = vpop.permute.xlu0 %758
    %v761 = vadd.f32 %v749, %v759
    %v762 = vtanh.pop %v761
    %763 = vrot.lane.b32.xlu0 %v756, 64
    %v764 = vpop.permute.xlu0 %763
    %v766 = vmul.f32 %v762, %v764
    %vm767 = vcmask 254976
    %v768 = vsel %vm767, %v766, 0.0
    %769 = vadd.xlane.f32.xlu0 %v768
    %v770 = vpop.xlane.xlu0 %769
    %v771 = vadd.f32 %v770, %v756
    %773 = vrot.lane.b32.xlu0 %v771, 32
    %v774 = vpop.permute.xlu0 %773
    %vm776 = vcmask 1024
    %777 = vst.msk [vmem:[%s3] sm:$0x3] %vm776, %v774
    // Predicated region
    $region22: #{critic_forward.1} parent=1 // pred_check
      _
    $region23: #{critic_forward.1} parent=1 // pred_check_branch
      %779 = sbr.rel (0) target = $region25
    $region24: #{critic_forward.1} parent=1 // pred_region
      _
    $region25: #{critic_forward.1} parent=1 // pred_fallthru
      _
    // Predicated region
    $region26: #{critic_forward.1} parent=1 // pred_check
      _
    $region27: #{critic_forward.1} parent=1 // pred_check_branch
      %781 = sbr.rel (0) target = $region29
    $region28: #{critic_forward.1} parent=1 // pred_region
      _
    $region29: #{critic_forward.1} parent=1 // pred_fallthru
      _
    %782 = vsyncpa [#allocation3], 1
    %783 = vsyncpa [#allocation5], 1

</llo_original>
